<compile_context>
chip_gen: v5e
topology: v5e:2x2
jax: 0.10.0
libtpu: 0.0.40
codegen_flags: <defaults>
</compile_context>

<pallas_src>
import functools

import jax
import jax.numpy as jnp
from jax import lax
from jax.experimental import pallas as pl
from jax.experimental.pallas import tpu as pltpu


def spatial_attention_kernel(x_ref, w_ref, b_ref, o_ref, *, approx_sigmoid=False):
    """One (C, rows, t) tile: scale = sigmoid(sum_c w[c]*x[c] + b); out = x*scale."""
    C = x_ref.shape[0]
    sp = x_ref.shape[1:]                       # (rows, t): dense sublane x lane slab

    # Dense per-channel MAC: each step is a full-occupancy VPU multiply-add on an
    # (rows, t) slab (scalar weight from SMEM broadcast over sublanes/lanes).
    # f32 accumulation; no full-tile f32 temporary is materialized.
    def mac(c, acc):
        return acc + x_ref[c].astype(jnp.float32) * w_ref[c]

    s = lax.fori_loop(0, C, mac,
                      jnp.full(sp, b_ref[0], jnp.float32),
                      unroll=True if C <= 32 else 8)

    if approx_sigmoid:
        # Keeps both transcendental pieces on the EUP slot (exp + approx vrcp).
        scale = pl.reciprocal(1.0 + jnp.exp(-s), approx=True)
    else:
        scale = jax.nn.sigmoid(s)              # dense (rows, t) f32

    x = x_ref[...]                             # native-dtype tile
    # Gate in the native dtype (sum/sigmoid stay f32; halves VALU/vregs for bf16).
    o_ref[...] = (x * scale[None].astype(x.dtype)).astype(o_ref.dtype)


def spatial_attention(x, conv_w, conv_b, *,
                      block_bytes=8 * 1024 * 1024,
                      vmem_limit_bytes=56 * 1024 * 1024,
                      target_programs=8,
                      approx_sigmoid=False,
                      donate_x=False):
    """SpatialAttention forward: out = x * sigmoid(conv1x1(x)).

    x: (N, C, H, W); conv_w: (1, C, 1, 1); conv_b: (1,).

    Defaults (8 MiB blocks, 56 MiB VMEM limit) are safe across v5e/v6e/v7x.
    On v5e/v6e (128 MiB VMEM) callers may raise block_bytes to ~16 MiB and
    vmem_limit_bytes to ~96 MiB; on v7x (64 MiB VMEM) keep the defaults.
    Callers that can donate x may pass donate_x=True to alias the output buffer.
    """
    N, C, H, W = x.shape
    HW = H * W
    itemsize = jnp.dtype(x.dtype).itemsize

    # Split the contiguous spatial axis into (rows, L) so the per-pixel scale /
    # sigmoid run on dense (rows, t) slabs (8 sublanes when possible).  This is a
    # pure reshape of trailing dims -- no data movement.
    rows = 8 if HW % 8 == 0 else (4 if HW % 4 == 0 else (2 if HW % 2 == 0 else 1))

    def _fits(r, lanes, limit):
        unit = C * r * itemsize                       # native bytes per lane unit
        return (4 * unit + r * 16) * lanes <= int(0.85 * limit)

    # Guard for very large C: even the minimal legal tile (128 lanes) can blow the
    # VMEM budget; first drop to rows=1 (8x smaller minimal block).
    if not _fits(rows, min(HW // rows, 128), vmem_limit_bytes):
        rows = 1
        if not _fits(rows, min(HW, 128), vmem_limit_bytes):
            # TODO(synk): split C across a third grid axis with a partial-sum scratch.
            vmem_limit_bytes = min(
                96 * 1024 * 1024,
                int((4 * C * itemsize + 16) * min(HW, 128) / 0.85) + (1 << 20))

    L = HW // rows
    x4 = x.reshape(N, C, rows, L)

    # Lane-tile selection: biggest 128-aligned tile under both the requested block
    # size and the VMEM budget (2x in + 2x out double buffers + f32 temporaries).
    unit = C * rows * itemsize
    per_lane = 4 * unit + rows * 16
    budget = int(0.85 * vmem_limit_bytes)
    max_lanes = min(max(block_bytes // unit, 1), max(budget // per_lane, 1))
    if L <= max_lanes:
        t = L
    else:
        t = max((max_lanes // 128) * 128, 128)

    # Make sure the grid exposes enough programs (v7x megacore: 2 TCs sharded over
    # the parallel grid axes need at least a couple of steps each).
    if L > 128 and N * pl.cdiv(L, t) < target_programs:
        want_tiles = min(pl.cdiv(target_programs, N), pl.cdiv(L, 128))
        t_cand = pl.cdiv(pl.cdiv(L, want_tiles), 128) * 128
        t = max(128, min(t, t_cand))

    grid = (N, pl.cdiv(L, t))                 # ragged lane tail handled by masking

    w1 = conv_w.reshape(C).astype(jnp.float32)    # (1, C, 1, 1) -> (C,) in SMEM
    b1 = conv_b.reshape(1).astype(jnp.float32)

    kernel = functools.partial(spatial_attention_kernel,
                               approx_sigmoid=approx_sigmoid)

    out4 = pl.pallas_call(
        kernel,
        out_shape=jax.ShapeDtypeStruct((N, C, rows, L), x.dtype),
        grid_spec=pltpu.PrefetchScalarGridSpec(
            num_scalar_prefetch=0,
            grid=grid,
            in_specs=[
                # N squeezed out; kernel sees a (C, rows, t) tile.
                pl.BlockSpec((None, C, rows, t), lambda n, j: (n, 0, 0, j)),
                pl.BlockSpec(memory_space=pltpu.MemorySpace.SMEM),
                pl.BlockSpec(memory_space=pltpu.MemorySpace.SMEM),
            ],
            out_specs=pl.BlockSpec((None, C, rows, t), lambda n, j: (n, 0, 0, j)),
        ),
        compiler_params=pltpu.CompilerParams(
            dimension_semantics=("parallel", "parallel"),
            vmem_limit_bytes=vmem_limit_bytes,
        ),
        input_output_aliases=({0: 0} if donate_x else {}),
    )(x4, w1, b1)

    return out4.reshape(N, C, H, W)


def spatial_attention_ref(x, conv_w, conv_b):
    # Pure-JAX reference of the PyTorch forward (1x1 conv + sigmoid gate).
    w = conv_w.reshape(-1).astype(jnp.float32)                      # (C,)
    s = jnp.einsum("nchw,c->nhw", x.astype(jnp.float32), w)
    scale = jax.nn.sigmoid(s + conv_b.astype(jnp.float32)[0])[:, None, :, :]
    return (x.astype(jnp.float32) * scale).astype(x.dtype)


if __name__ == "__main__":
    key = jax.random.PRNGKey(0)
    kx, kw, kb, kx2 = jax.random.split(key, 4)

    N, C, H, W = 2, 4, 16, 16
    x = jax.random.normal(kx, (N, C, H, W), dtype=jnp.float32)

    # Deterministic conv params (PyTorch default: U(-1/sqrt(fan_in), 1/sqrt(fan_in)))
    fan_in = C * 1 * 1
    bound = 1.0 / (fan_in ** 0.5)
    conv_w = jax.random.uniform(kw, (1, C, 1, 1), jnp.float32, -bound, bound)
    conv_b = jax.random.uniform(kb, (1,), jnp.float32, -bound, bound)

    out = jax.block_until_ready(spatial_attention(x, conv_w, conv_b))
    ref = spatial_attention_ref(x, conv_w, conv_b)
    assert out.shape == (N, C, H, W)
    assert jnp.allclose(out, ref, atol=1e-5, rtol=1e-5), "mismatch (8-row path)"

    # Odd spatial size exercises the rows<8 fallback path.
    x2 = jax.random.normal(kx2, (1, 3, 7, 9), dtype=jnp.float32)
    out2 = jax.block_until_ready(spatial_attention(x2, conv_w[:, :3], conv_b))
    ref2 = spatial_attention_ref(x2, conv_w[:, :3], conv_b)
    assert jnp.allclose(out2, ref2, atol=1e-5, rtol=1e-5), "mismatch (fallback path)"

    print("KERNEL_OK")
</pallas_src>

<mosaic_0001>
module attributes {stable_mosaic.version = 11 : i64} {
  func.func @spatial_attention_kernel(%arg0: i32, %arg1: i32, %arg2: memref<1x4x8x32xf32, #tpu.memory_space<vmem>>, %arg3: memref<4xf32, #tpu.memory_space<smem>>, %arg4: memref<1xf32, #tpu.memory_space<smem>>, %arg5: memref<1x4x8x32xf32, #tpu.memory_space<vmem>>) attributes {dimension_semantics = [#tpu.dimension_semantics<parallel>, #tpu.dimension_semantics<parallel>], iteration_bounds = array<i64: 2, 1>, scalar_prefetch = 0 : i64, scratch_operands = 0 : i64, tpu.core_type = #tpu.core_type<tc>, window_params = [{transform_indices = @transform_0, window_bounds = array<i64: 1, 4, 8, 32>}, {transform_indices = @transform_1, window_bounds = array<i64: 4>}, {transform_indices = @transform_2, window_bounds = array<i64: 1>}, {transform_indices = @transform_3, window_bounds = array<i64: 1, 4, 8, 32>}]} {
    %c0 = arith.constant 0 : index
    %0 = memref.load %arg4[%c0] : memref<1xf32, #tpu.memory_space<smem>>
    %1 = vector.broadcast %0 : f32 to vector<8x32xf32>
    %c0_i32 = arith.constant 0 : i32
    %c0_0 = arith.constant 0 : index
    %2 = arith.index_cast %c0_i32 : i32 to index
    %c0_1 = arith.constant 0 : index
    %c0_2 = arith.constant 0 : index
    %3 = vector.load %arg2[%c0_0, %2, %c0_1, %c0_2] : memref<1x4x8x32xf32, #tpu.memory_space<vmem>>, vector<1x1x8x32xf32>
    %4 = vector.shape_cast %3 : vector<1x1x8x32xf32> to vector<8x32xf32>
    %5 = arith.index_cast %c0_i32 : i32 to index
    %6 = memref.load %arg3[%5] : memref<4xf32, #tpu.memory_space<smem>>
    %7 = vector.broadcast %6 : f32 to vector<8x32xf32>
    %8 = arith.mulf %4, %7 : vector<8x32xf32>
    %9 = arith.addf %1, %8 : vector<8x32xf32>
    %c1_i32 = arith.constant 1 : i32
    %c0_3 = arith.constant 0 : index
    %10 = arith.index_cast %c1_i32 : i32 to index
    %c0_4 = arith.constant 0 : index
    %c0_5 = arith.constant 0 : index
    %11 = vector.load %arg2[%c0_3, %10, %c0_4, %c0_5] : memref<1x4x8x32xf32, #tpu.memory_space<vmem>>, vector<1x1x8x32xf32>
    %12 = vector.shape_cast %11 : vector<1x1x8x32xf32> to vector<8x32xf32>
    %13 = arith.index_cast %c1_i32 : i32 to index
    %14 = memref.load %arg3[%13] : memref<4xf32, #tpu.memory_space<smem>>
    %15 = vector.broadcast %14 : f32 to vector<8x32xf32>
    %16 = arith.mulf %12, %15 : vector<8x32xf32>
    %17 = arith.addf %9, %16 : vector<8x32xf32>
    %c2_i32 = arith.constant 2 : i32
    %c0_6 = arith.constant 0 : index
    %18 = arith.index_cast %c2_i32 : i32 to index
    %c0_7 = arith.constant 0 : index
    %c0_8 = arith.constant 0 : index
    %19 = vector.load %arg2[%c0_6, %18, %c0_7, %c0_8] : memref<1x4x8x32xf32, #tpu.memory_space<vmem>>, vector<1x1x8x32xf32>
    %20 = vector.shape_cast %19 : vector<1x1x8x32xf32> to vector<8x32xf32>
    %21 = arith.index_cast %c2_i32 : i32 to index
    %22 = memref.load %arg3[%21] : memref<4xf32, #tpu.memory_space<smem>>
    %23 = vector.broadcast %22 : f32 to vector<8x32xf32>
    %24 = arith.mulf %20, %23 : vector<8x32xf32>
    %25 = arith.addf %17, %24 : vector<8x32xf32>
    %c3_i32 = arith.constant 3 : i32
    %c0_9 = arith.constant 0 : index
    %26 = arith.index_cast %c3_i32 : i32 to index
    %c0_10 = arith.constant 0 : index
    %c0_11 = arith.constant 0 : index
    %27 = vector.load %arg2[%c0_9, %26, %c0_10, %c0_11] : memref<1x4x8x32xf32, #tpu.memory_space<vmem>>, vector<1x1x8x32xf32>
    %28 = vector.shape_cast %27 : vector<1x1x8x32xf32> to vector<8x32xf32>
    %29 = arith.index_cast %c3_i32 : i32 to index
    %30 = memref.load %arg3[%29] : memref<4xf32, #tpu.memory_space<smem>>
    %31 = vector.broadcast %30 : f32 to vector<8x32xf32>
    %32 = arith.mulf %28, %31 : vector<8x32xf32>
    %33 = arith.addf %25, %32 : vector<8x32xf32>
    %c4_i32 = arith.constant 4 : i32
    %34 = arith.negf %33 : vector<8x32xf32>
    %35 = math.exp %34 : vector<8x32xf32>
    %cst = arith.constant 1.000000e+00 : f32
    %36 = vector.broadcast %cst : f32 to vector<8x32xf32>
    %37 = arith.addf %36, %35 : vector<8x32xf32>
    %38 = arith.divf %36, %37 : vector<8x32xf32>
    %c0_12 = arith.constant 0 : index
    %c0_13 = arith.constant 0 : index
    %c0_14 = arith.constant 0 : index
    %c0_15 = arith.constant 0 : index
    %39 = vector.load %arg2[%c0_12, %c0_13, %c0_14, %c0_15] : memref<1x4x8x32xf32, #tpu.memory_space<vmem>>, vector<1x4x8x32xf32>
    %40 = vector.shape_cast %39 : vector<1x4x8x32xf32> to vector<4x8x32xf32>
    %41 = vector.shape_cast %38 : vector<8x32xf32> to vector<1x8x32xf32>
    %42 = vector.broadcast %41 : vector<1x8x32xf32> to vector<4x8x32xf32>
    %43 = arith.mulf %40, %42 : vector<4x8x32xf32>
    %c0_16 = arith.constant 0 : index
    %c0_17 = arith.constant 0 : index
    %c0_18 = arith.constant 0 : index
    %c0_19 = arith.constant 0 : index
    %44 = vector.load %arg5[%c0_16, %c0_17, %c0_18, %c0_19] : memref<1x4x8x32xf32, #tpu.memory_space<vmem>>, vector<1x4x8x32xf32>
    %45 = vector.shape_cast %44 : vector<1x4x8x32xf32> to vector<4x8x32xf32>
    %46 = vector.shape_cast %43 : vector<4x8x32xf32> to vector<1x4x8x32xf32>
    tpu.vector_store %arg5[%c0_16, %c0_17, %c0_18, %c0_19], %46 {strides = array<i32>} : memref<1x4x8x32xf32, #tpu.memory_space<vmem>>, vector<1x4x8x32xf32>,
    return
  }
  func.func @transform_0(%arg0: i32, %arg1: i32) -> (i32, i32, i32, i32) {
    %c0_i32 = arith.constant 0 : i32
    %c0_i32_0 = arith.constant 0 : i32
    %c0_i32_1 = arith.constant 0 : i32
    return %arg0, %c0_i32, %c0_i32_0, %arg1 : i32, i32, i32, i32
  }
  func.func @transform_1(%arg0: i32, %arg1: i32) -> i32 {
    %c0_i32 = arith.constant 0 : i32
    %c0_i32_0 = arith.constant 0 : i32
    return %c0_i32 : i32
  }
  func.func @transform_2(%arg0: i32, %arg1: i32) -> i32 {
    %c0_i32 = arith.constant 0 : i32
    %c0_i32_0 = arith.constant 0 : i32
    return %c0_i32 : i32
  }
  func.func @transform_3(%arg0: i32, %arg1: i32) -> (i32, i32, i32, i32) {
    %c0_i32 = arith.constant 0 : i32
    %c0_i32_0 = arith.constant 0 : i32
    %c0_i32_1 = arith.constant 0 : i32
    return %arg0, %c0_i32, %c0_i32_0, %arg1 : i32, i32, i32, i32
  }
}

</mosaic_0001>

<llo_original>
// kernel: tpu_custom_call.1
$region0: #{tpu_custom_call.1}
  #allocation0 [shape = 'u32[]', space=smem, size = 0x4, offset = 0x4, fixed_abs, tag = 'smem constant byte address 0x4 - core index']
  #allocation1 [shape = 'u32[72,128]{1,0:T(1,128)}', space=vmem, size = 0x9000, scoped, tag = 'internal scratch']
  #allocation2 [shape = 'f32[1]{0:T(128)S(6)}', space=smem, size = 0x200, scoped, tag = 'scoped memory for tpu_custom_call.1']
  %s0 = inlined_call_operand.hbm [shape: f32[2,4,8,32], index: 0, kind: input, shape index: {}]
  %s1 = inlined_call_operand.vmem [shape: f32[4], index: 1, kind: input, shape index: {}]
  %s2 = inlined_call_operand.<no memory space> [shape: f32[1], index: 2, kind: input, shape index: {}]
  %s3 = inlined_call_operand.hbm [shape: f32[2,4,8,32], index: 3, kind: output, shape index: {}]
  %s4 = sld [smem:[#allocation0]]
  $region53: #{tpu_custom_call.1} parent=0
    _
  %s6 = ssub.s32 1, %s4
  %s7 = scalar_select 0, %s6, %s4
  %8 = sst [smem:[#allocation2]] %s2
  $region1: #{tpu_custom_call.1} parent=0
    #allocation3 [shape = 'u8[32768]{0}', space=vmem, size = 0x8000, scoped, tag = 'input window, operand 0']
    #allocation4 [shape = 's32[2]{0}', space=sflag, size = 0x8, scoped, tag = 'scoped memory for tpu_custom_call.1']
    #allocation5 [shape = 's32[2]{0}', space=sflag, size = 0x8, scoped, tag = 'scoped memory for tpu_custom_call.1']
    #allocation6 [shape = 's32[2]{0}', space=sflag, size = 0x8, scoped, tag = 'scoped memory for tpu_custom_call.1']
    #allocation7 [shape = 'u8[512]{0}', space=smem, size = 0x200, scoped, tag = 'input window, operand 1, single buffered']
    #allocation8 [shape = 'u8[32768]{0}', space=vmem, size = 0x8000, scoped, tag = 'output window, operand 0']
    %9 = vsyncpa [#allocation4], 0
    %s10 = scalar_lea.sflag [#allocation4], 1
    %11 = vsyncpa %s10, 0
    %12 = vsyncpa [#allocation6], 0
    %13 = vsyncpa [#allocation5], 0
    %s14 = scalar_lea.sflag [#allocation5], 1
    %15 = vsyncpa %s14, 0
    loop: start=0, step=1, limit=4
    $region2: #{tpu_custom_call.1} parent=1 // loop_pre_header
      _
    $region3: #{tpu_custom_call.1} parent=1 // loop_header
      %s17 = sphi 0, %s21
      %p18 = scmp.ge.s32.totalorder %s17, 4
      %s24 = sphi 0, %s36
      %s25 = sphi 0, %s32
      %s26 = sphi 0, %s24
      %s27 = sphi 0, %s25
      %s28 = sphi 0, %s26
      %s29 = sphi 0, %s27
      %s41 = sphi 0, %s43
      %s44 = sphi 0, %s41
      %s45 = sphi 0, %s44
      %s61 = sphi 0, %s45
      %s65 = sphi 0, %s65
      %s67 = sphi 0, %s65
      %s68 = sphi 0, %s67
      %s82 = sphi 0, %s68
      %s86 = sphi 0, %s86
      %s88 = sphi 0, %s86
      %s89 = sphi 0, %s88
      %s103 = sphi 0, %s89
      %s111 = sphi 0, %s113
      %s114 = sphi 0, %s111
      %s115 = sphi 0, %s114
      %s131 = sphi 0, %s115
    $region4: #{tpu_custom_call.1} parent=1 // loop_header_branch
      %20 = sbr.rel (%p18) target = $region8
    $region5: #{tpu_custom_call.1} parent=1 // loop_body
      %s22 = ssub.s32 %s17, 1
      %s23 = ssub.s32 %s17, 2
      %s30 = sadd.s32 1, %s25
      %p31 = scmp.ge.s32.totalorder %s30, 1
      %s32 = scalar_select %p31, 0, %s30
      %s33 = sadd.s32 1, %s24
      %s34 = scalar_select %p31, %s33, %s24
      %p35 = scmp.ge.s32.totalorder %s34, 2
      %s36 = scalar_select %p35, 0, %s34
      %s37 = ssub.s32 %s24, %s36
      %s38 = ssub.s32 %s25, %s32
      %s39 = sor.u32 %s37, %s38
      %p40 = scmp.eq.s32.totalorder %s39, 0
      %s42 = sadd.s32 %s41, 1
      %s43 = scalar_select %p40, %s41, %s42
      %p46 = pneg %p40
      %p47 = scmp.eq.s32.totalorder %s17, 1
      %p48 = por %p46, %p47
      %p49 = scmp.ne.s32.totalorder %s41, %s44
      %p50 = scmp.eq.s32.totalorder %s17, 0
      %p51 = por %p49, %p50
      %p52 = scmp.ne.s32.totalorder %s41, %s44
      %p53 = scmp.eq.s32.totalorder %s22, 1
      %p54 = por %p52, %p53
      %p55 = scmp.ne.s32.totalorder %s44, %s45
      %p56 = scmp.eq.s32.totalorder %s22, 0
      %p57 = por %p55, %p56
      %p58 = scmp.ne.s32.totalorder %s44, %s45
      %p59 = scmp.eq.s32.totalorder %s23, 1
      %p60 = por %p58, %p59
      %p62 = scmp.ne.s32.totalorder %s45, %s61
      %p63 = scmp.eq.s32.totalorder %s23, 0
      %p64 = por %p62, %p63
      %s66 = sadd.s32 %s65, 1
      %p69 = scmp.eq.s32.totalorder %s17, 1
      %p70 = scmp.ne.s32.totalorder %s65, %s67
      %p71 = scmp.eq.s32.totalorder %s17, 0
      %p72 = por %p70, %p71
      %p73 = scmp.ne.s32.totalorder %s65, %s67
      %p74 = scmp.eq.s32.totalorder %s22, 1
      %p75 = por %p73, %p74
      %p76 = scmp.ne.s32.totalorder %s67, %s68
      %p77 = scmp.eq.s32.totalorder %s22, 0
      %p78 = por %p76, %p77
      %p79 = scmp.ne.s32.totalorder %s67, %s68
      %p80 = scmp.eq.s32.totalorder %s23, 1
      %p81 = por %p79, %p80
      %p83 = scmp.ne.s32.totalorder %s68, %s82
      %p84 = scmp.eq.s32.totalorder %s23, 0
      %p85 = por %p83, %p84
      %s87 = sadd.s32 %s86, 1
      %p90 = scmp.eq.s32.totalorder %s17, 1
      %p91 = scmp.ne.s32.totalorder %s86, %s88
      %p92 = scmp.eq.s32.totalorder %s17, 0
      %p93 = por %p91, %p92
      %p94 = scmp.ne.s32.totalorder %s86, %s88
      %p95 = scmp.eq.s32.totalorder %s22, 1
      %p96 = por %p94, %p95
      %p97 = scmp.ne.s32.totalorder %s88, %s89
      %p98 = scmp.eq.s32.totalorder %s22, 0
      %p99 = por %p97, %p98
      %p100 = scmp.ne.s32.totalorder %s88, %s89
      %p101 = scmp.eq.s32.totalorder %s23, 1
      %p102 = por %p100, %p101
      %p104 = scmp.ne.s32.totalorder %s89, %s103
      %p105 = scmp.eq.s32.totalorder %s23, 0
      %p106 = por %p104, %p105
      %s107 = ssub.s32 %s24, %s36
      %s108 = ssub.s32 %s25, %s32
      %s109 = sor.u32 %s107, %s108
      %p110 = scmp.eq.s32.totalorder %s109, 0
      %s112 = sadd.s32 %s111, 1
      %s113 = scalar_select %p110, %s111, %s112
      %p116 = pneg %p110
      %p117 = scmp.eq.s32.totalorder %s17, 1
      %p118 = por %p116, %p117
      %p119 = scmp.ne.s32.totalorder %s111, %s114
      %p120 = scmp.eq.s32.totalorder %s17, 0
      %p121 = por %p119, %p120
      %p122 = scmp.ne.s32.totalorder %s111, %s114
      %p123 = scmp.eq.s32.totalorder %s22, 1
      %p124 = por %p122, %p123
      %p125 = scmp.ne.s32.totalorder %s114, %s115
      %p126 = scmp.eq.s32.totalorder %s22, 0
      %p127 = por %p125, %p126
      %p128 = scmp.ne.s32.totalorder %s114, %s115
      %p129 = scmp.eq.s32.totalorder %s23, 1
      %p130 = por %p128, %p129
      %p132 = scmp.ne.s32.totalorder %s115, %s131
      %p133 = scmp.eq.s32.totalorder %s23, 0
      %p134 = por %p132, %p133
      %p135 = scmp.le.s32.totalorder 1, %s17
      %p136 = scmp.lt.s32.totalorder %s17, 3
      %p137 = pnand %p135, %p136
      %p138 = pneg %p137
      // Predicated region
      $region9: #{tpu_custom_call.1} parent=5 // pred_check
        _
      $region10: #{tpu_custom_call.1} parent=5 // pred_check_branch
        %140 = sbr.rel (%p137) target = $region12
      $region11: #{tpu_custom_call.1} parent=5 // pred_region
        %s141 = ssub.s32 %s17, 1
        // Predicated region
        $region13: #{tpu_custom_call.1} parent=11 // pred_check
          %p142 = pneg %p78
        $region14: #{tpu_custom_call.1} parent=11 // pred_check_branch
          %144 = sbr.rel (%p142) target = $region16
        $region15: #{tpu_custom_call.1} parent=11 // pred_region
          %146 = vsyncadd [#allocation6], 0
          %s148 = sshll.u32 %s1, 4
          %s149 = int_to_ptr.vmem [resolvable:$true] %s148
          %151 = dma.vmem_to_smem %s149, 16, [#allocation7], [#allocation6]
        $region16: #{tpu_custom_call.1} parent=11 // pred_fallthru
          _
        // Predicated region
        $region17: #{tpu_custom_call.1} parent=11 // pred_check
          %p152 = pneg %p99
        $region18: #{tpu_custom_call.1} parent=11 // pred_check_branch
          %154 = sbr.rel (%p152) target = $region20
        $region19: #{tpu_custom_call.1} parent=11 // pred_region
          _
        $region20: #{tpu_custom_call.1} parent=11 // pred_fallthru
          _
      $region12: #{tpu_custom_call.1} parent=5 // pred_fallthru
        _
      %p155 = scmp.lt.s32.totalorder %s17, 2
      // Predicated region
      $region21: #{tpu_custom_call.1} parent=5 // pred_check
        %p156 = pneg %p155
      $region22: #{tpu_custom_call.1} parent=5 // pred_check_branch
        %158 = sbr.rel (%p156) target = $region24
      $region23: #{tpu_custom_call.1} parent=5 // pred_region
        // Predicated region
        $region25: #{tpu_custom_call.1} parent=23 // pred_check
          %p159 = pneg %p51
        $region26: #{tpu_custom_call.1} parent=23 // pred_check_branch
          %161 = sbr.rel (%p159) target = $region28
        $region27: #{tpu_custom_call.1} parent=23 // pred_region
          %s162 = sand.u32 %s41, 1
          %s163 = scalar_lea.sflag [#allocation4], %s162
          %s164 = sand.u32 %s41, 1
          %s165 = smul.addr %s164, 32
          %s166 = scalar_lea.vmem [#allocation3], %s165
          %168 = vsyncadd %s163, 0
          %s169 = smul.addr %s24, 4
          %s170 = sadd.s32 %s25, %s169
          %s171 = smul.addr %s170, 8
          %s172 = scalar_lea.hbm %s0, %s171
          %s173 = sshll.u32 %s172, 4
          %s174 = int_to_ptr.hbm [resolvable:$true] %s173
          %s175 = sshll.u32 %s166, 4
          %s176 = int_to_ptr.vmem [resolvable:$true] %s175
          %181 = dma.hbm_to_vmem [thread:$0]  %s174, 512, %s176, %s163, 128, 128, 8
        $region28: #{tpu_custom_call.1} parent=23 // pred_fallthru
          _
      $region24: #{tpu_custom_call.1} parent=5 // pred_fallthru
        _
      %p182 = scmp.le.s32.totalorder 1, %s17
      %p183 = scmp.lt.s32.totalorder %s17, 3
      %p184 = pnand %p182, %p183
      %p185 = pneg %p184
      // Predicated region
      $region29: #{tpu_custom_call.1} parent=5 // pred_check
        _
      $region30: #{tpu_custom_call.1} parent=5 // pred_check_branch
        %187 = sbr.rel (%p184) target = $region32
      $region31: #{tpu_custom_call.1} parent=5 // pred_region
        %s188 = ssub.s32 %s17, 1
        %s189 = sand.u32 %s44, 1
        %s190 = scalar_lea.sflag [#allocation4], %s189
        %s191 = sand.u32 %s44, 1
        %s192 = smul.addr %s191, 32
        %s193 = scalar_lea.vmem [#allocation3], %s192
        // Predicated region
        $region33: #{tpu_custom_call.1} parent=31 // pred_check
          %p194 = pneg %p57
        $region34: #{tpu_custom_call.1} parent=31 // pred_check_branch
          %196 = sbr.rel (%p194) target = $region36
        $region35: #{tpu_custom_call.1} parent=31 // pred_region
          %198 = dma.done %s190, 512
        $region36: #{tpu_custom_call.1} parent=31 // pred_fallthru
          _
        // Predicated region
        $region37: #{tpu_custom_call.1} parent=31 // pred_check
          %p199 = pneg %p78
        $region38: #{tpu_custom_call.1} parent=31 // pred_check_branch
          %201 = sbr.rel (%p199) target = $region40
        $region39: #{tpu_custom_call.1} parent=31 // pred_region
          %203 = dma.done [#allocation6], 16
        $region40: #{tpu_custom_call.1} parent=31 // pred_fallthru
          _
        %204 = sfence
        %s205 = sand.u32 %s44, 1
        %s206 = scalar_lea.sflag [#allocation4], %s205
        %s207 = sand.u32 %s44, 1
        %s208 = smul.addr %s207, 32
        %s209 = scalar_lea.vmem [#allocation3], %s208
        %p210 = pneg %p57
        %p211 = pneg %p54
        %p212 = pneg %p78
        %p213 = pneg %p75
        %p214 = pneg %p99
        %p215 = pneg %p96
        %p216 = pneg %p127
        %p217 = pneg %p124
        %s218 = sand.u32 %s114, 1
        %s219 = scalar_lea.sflag [#allocation5], %s218
        %s220 = sand.u32 %s114, 1
        %s221 = smul.addr %s220, 32
        %s222 = scalar_lea.vmem [#allocation8], %s221
        %s223 = sld [smem:[#allocation2]]
        %v224 = vstv %s223
        %v225 = vld [vmem:[%s193] sm:$0xff]
        %s226 = sld [smem:[#allocation7]]
        %v227 = vstv %s226
        %v228 = vmul.f32 %v225, %v227
        %v229 = vadd.f32 %v224, %v228
        %s230 = scalar_lea.vmem %s193, 8 [#allocation3]
        %v231 = vld [vmem:[%s230] sm:$0xff]
        %s232 = sld [smem:[#allocation7 + $0x1]]
        %v233 = vstv %s232
        %v234 = vmul.f32 %v231, %v233
        %v235 = vadd.f32 %v229, %v234
        %s236 = scalar_lea.vmem %s193, 16 [#allocation3]
        %v237 = vld [vmem:[%s236] sm:$0xff]
        %s238 = sld [smem:[#allocation7 + $0x2]]
        %v239 = vstv %s238
        %v240 = vmul.f32 %v237, %v239
        %v241 = vadd.f32 %v235, %v240
        %s242 = scalar_lea.vmem %s193, 24 [#allocation3]
        %v243 = vld [vmem:[%s242] sm:$0xff]
        %s244 = sld [smem:[#allocation7 + $0x3]]
        %v245 = vstv %s244
        %v246 = vmul.f32 %v243, %v245
        %v247 = vadd.f32 %v241, %v246
        %v248 = vxor.u32 %v247, 2147483648
        %v249 = vmul.f32 %v248, 1.442695
        %v250 = vpow.pop %v249
        %v251 = vadd.f32 %v250, 1.0
        %v252 = vrcp.pop %v251
        %v253 = vmul.f32 %v251, %v252
        %v254 = vsub.f32 1.0, %v253
        %v255 = vmul.f32 %v252, %v254
        %v256 = vadd.f32 %v252, %v255
        %vm257 = vweird.f32 %v251
        %vm258 = vweird.f32 %v252
        %vm259 = vmor %vm257, %vm258
        %v260 = vsel %vm259, %v252, %v256
        %v261 = vand.u32 2147483647, %v251
        %vm262 = vcmp.eq.f32.partialorder %v261, 8.507059e+37
        %v263 = vand.u32 %v251, 2147483648
        %v264 = vor.u32 1.1754944e-38, %v263
        %v265 = vsel %vm262, %v264, %v260
        %v266 = vmul.f32 1.0, %v265
        %v267 = vld [vmem:[%s193] sm:$0xff]
        %v268 = vld [vmem:[%s193 + $0x8] sm:$0xff]
        %v269 = vld [vmem:[%s193 + $0x10] sm:$0xff]
        %v270 = vld [vmem:[%s193 + $0x18] sm:$0xff]
        %v271 = vmul.f32 %v267, %v266
        %v272 = vmul.f32 %v268, %v266
        %v273 = vmul.f32 %v269, %v266
        %v274 = vmul.f32 %v270, %v266
        %vm275 = vcmask 261120
        %276 = vst.msk [vmem:[%s222] sm:$0xff] %vm275, %v271
        %277 = vst.msk [vmem:[%s222 + $0x8] sm:$0xff] %vm275, %v272
        %278 = vst.msk [vmem:[%s222 + $0x10] sm:$0xff] %vm275, %v273
        %279 = vst.msk [vmem:[%s222 + $0x18] sm:$0xff] %vm275, %v274
        %s280 = sand.u32 %s114, 1
        %s281 = scalar_lea.sflag [#allocation5], %s280
        %s282 = sand.u32 %s114, 1
        %s283 = smul.addr %s282, 32
        %s284 = scalar_lea.vmem [#allocation8], %s283
        // Predicated region
        $region41: #{tpu_custom_call.1} parent=31 // pred_check
          %p285 = pneg %p124
        $region42: #{tpu_custom_call.1} parent=31 // pred_check_branch
          %287 = sbr.rel (%p285) target = $region44
        $region43: #{tpu_custom_call.1} parent=31 // pred_region
          %289 = vsyncadd %s281, 0
          %s290 = smul.addr %s26, 4
          %s291 = sadd.s32 %s27, %s290
          %s292 = smul.addr %s291, 8
          %s293 = scalar_lea.hbm %s3, %s292
          %s294 = sshll.u32 %s284, 4
          %s295 = int_to_ptr.vmem [resolvable:$true] %s294
          %s296 = sshll.u32 %s293, 4
          %s297 = int_to_ptr.hbm [resolvable:$true] %s296
          %302 = dma.vmem_to_hbm [thread:$0]  %s295, 512, %s297, %s281, 128, 128, 8
        $region44: #{tpu_custom_call.1} parent=31 // pred_fallthru
          _
      $region32: #{tpu_custom_call.1} parent=5 // pred_fallthru
        _
      %p303 = scmp.le.s32.totalorder 2, %s17
      // Predicated region
      $region45: #{tpu_custom_call.1} parent=5 // pred_check
        %p304 = pneg %p303
      $region46: #{tpu_custom_call.1} parent=5 // pred_check_branch
        %306 = sbr.rel (%p304) target = $region48
      $region47: #{tpu_custom_call.1} parent=5 // pred_region
        %s307 = ssub.s32 %s17, 2
        // Predicated region
        $region49: #{tpu_custom_call.1} parent=47 // pred_check
          %p308 = pneg %p130
        $region50: #{tpu_custom_call.1} parent=47 // pred_check_branch
          %310 = sbr.rel (%p308) target = $region52
        $region51: #{tpu_custom_call.1} parent=47 // pred_region
          %s311 = sand.u32 %s115, 1
          %s312 = scalar_lea.sflag [#allocation5], %s311
          %s313 = sand.u32 %s115, 1
          %s314 = smul.addr %s313, 32
          %s315 = scalar_lea.vmem [#allocation8], %s314
          %317 = dma.done %s312, 512
        $region52: #{tpu_custom_call.1} parent=47 // pred_fallthru
          _
      $region48: #{tpu_custom_call.1} parent=5 // pred_fallthru
        _
    $region6: #{tpu_custom_call.1} parent=1 // loop_footer
      %s21 = sadd.s32 1, %s17
    $region7: #{tpu_custom_call.1} parent=1 // loop_footer_branch
      %16 = sbr.rel target = $region3
    $region8: #{tpu_custom_call.1} parent=1 // loop_exit
      _
    %318 = vsyncpa [#allocation4], 1
    %s319 = scalar_lea.sflag [#allocation4], 1
    %320 = vsyncpa %s319, 1
    %321 = vsyncpa [#allocation5], 1
    %s322 = scalar_lea.sflag [#allocation5], 1
    %323 = vsyncpa %s322, 1
    %324 = vsyncpa [#allocation6], 1
    %s325 = scalar_lea.sflag [#allocation6], 1
    %326 = vsyncpa %s325, 1

</llo_original>
